<compile_context>
chip_gen: v5e
topology: v5e:2x2
jax: 0.10.0
libtpu: 0.0.40
codegen_flags: <defaults>
</compile_context>

<pallas_src>
import jax
import jax.numpy as jnp
from jax.experimental import pallas as pl
from jax.experimental.pallas import tpu as pltpu

INPUT_SIZE = 112
HIDDEN_SIZE = 64
TILE_B_MAX = 2048      # max rows per grid step (per tensor; kernel does 3 tensors/step)
SINGLE_TILE_B = 512    # below this: one un-padded tile (2-core split not worth it)


def _round_up(x, m):
    return ((x + m - 1) // m) * m


def _cdiv(a, b):
    return -(-a // b)


def _siamese_kernel(a_ref, p_ref, n_ref, w1_ref, b1_ref, w2_ref, b2_ref,
                    ao_ref, po_ref, no_ref):
    """Shared-encoder pass on one batch tile of each triplet member.

    a/p/n_ref : (tile_b, 112) f32 activations (cast to bf16 in-kernel for the MXU)
    w1_ref    : (112, 64) bf16      b1_ref : (1, 64) f32
    w2_ref    : (64, 64)  bf16      b2_ref : (1, 64) f32
    a/p/n out : (tile_b, 64) f32
    """
    w1 = w1_ref[...]
    b1 = b1_ref[...]
    w2 = w2_ref[...]
    b2 = b2_ref[...]

    def encode(x_f32):
        # fc1: bf16 MXU matmul with f32 accumulation; bias + ReLU in f32 (v5e-safe).
        h = jnp.dot(x_f32.astype(jnp.bfloat16), w1,
                    preferred_element_type=jnp.float32)
        h = jnp.maximum(h + b1, 0.0)
        # dropout(p=0.1) is identity in eval/inference mode.
        # TODO(synk): training-mode dropout (random mask + 1/(1-p) scaling) not implemented.
        # fc2: bf16 MXU matmul with f32 accumulation; bias in f32.
        y = jnp.dot(h.astype(jnp.bfloat16), w2,
                    preferred_element_type=jnp.float32)
        return y + b2

    ao_ref[...] = encode(a_ref[...])
    po_ref[...] = encode(p_ref[...])
    no_ref[...] = encode(n_ref[...])


def prepare_params(params):
    """One-time weight prep (outside the per-call hot path).

    PyTorch-convention weights (out, in) -> (in, out); matmul operands to bf16;
    biases as (1, H) f32. No output-dim padding (review: it doubled writeback bytes).
    """
    w1 = params["fc1_w"].T.astype(jnp.bfloat16)              # (112, 64)
    b1 = params["fc1_b"].reshape(1, -1).astype(jnp.float32)  # (1, 64)
    w2 = params["fc2_w"].T.astype(jnp.bfloat16)              # (64, 64)
    b2 = params["fc2_b"].reshape(1, -1).astype(jnp.float32)  # (1, 64)
    return {"w1": w1, "b1": b1, "w2": w2, "b2": b2}


def _tile_plan(B):
    """Static tile plan: (tile_b, padded_B, num_tiles)."""
    if B <= SINGLE_TILE_B:
        return B, B, 1                       # one tile, block == full dims, no padding
    num_tiles = max(2, _cdiv(B, TILE_B_MAX))  # >=2 tiles so both v7x TCs get work
    tile_b = min(TILE_B_MAX, _round_up(_cdiv(B, num_tiles), 16))
    b_pad = _round_up(B, tile_b)
    return tile_b, b_pad, b_pad // tile_b


@jax.jit
def siamese_forward(anchor, positive, negative, prepped):
    B = anchor.shape[0]
    tile_b, b_pad, num_tiles = _tile_plan(B)

    def maybe_pad(x):
        return x if b_pad == B else jnp.pad(x, ((0, b_pad - B), (0, 0)))

    a = maybe_pad(anchor)
    p = maybe_pad(positive)
    n = maybe_pad(negative)

    # Activations / outputs: tiled over the batch dim. Weights/biases: constant
    # index_map -> fetched once, VMEM-resident across all grid steps.
    act_spec = pl.BlockSpec((tile_b, INPUT_SIZE), lambda i: (i, 0))
    out_spec = pl.BlockSpec((tile_b, HIDDEN_SIZE), lambda i: (i, 0))
    in_specs = [
        act_spec, act_spec, act_spec,
        pl.BlockSpec((INPUT_SIZE, HIDDEN_SIZE), lambda i: (0, 0)),
        pl.BlockSpec((1, HIDDEN_SIZE), lambda i: (0, 0)),
        pl.BlockSpec((HIDDEN_SIZE, HIDDEN_SIZE), lambda i: (0, 0)),
        pl.BlockSpec((1, HIDDEN_SIZE), lambda i: (0, 0)),
    ]

    rows = 3 * b_pad  # total encoder rows actually processed
    cost = pl.CostEstimate(
        flops=2 * rows * (INPUT_SIZE * HIDDEN_SIZE + HIDDEN_SIZE * HIDDEN_SIZE),
        transcendentals=0,
        bytes_accessed=(rows * INPUT_SIZE * 4           # f32 activations in
                        + rows * HIDDEN_SIZE * 4        # f32 embeddings out
                        + INPUT_SIZE * HIDDEN_SIZE * 2  # bf16 w1
                        + HIDDEN_SIZE * HIDDEN_SIZE * 2  # bf16 w2
                        + 2 * HIDDEN_SIZE * 4),          # f32 biases
    )

    out_sds = jax.ShapeDtypeStruct((b_pad, HIDDEN_SIZE), jnp.float32)
    a_out, p_out, n_out = pl.pallas_call(
        _siamese_kernel,
        grid=(num_tiles,),
        in_specs=in_specs,
        out_specs=[out_spec, out_spec, out_spec],
        out_shape=(out_sds, out_sds, out_sds),
        compiler_params=pltpu.CompilerParams(
            dimension_semantics=("parallel",)),
        cost_estimate=cost,
    )(a, p, n, prepped["w1"], prepped["b1"], prepped["w2"], prepped["b2"])

    if b_pad != B:
        a_out, p_out, n_out = a_out[:B], p_out[:B], n_out[:B]
    return a_out, p_out, n_out


def init_params(key):
    """Deterministic synthetic init matching nn.Linear shapes (PyTorch convention)."""
    k1, k2, k3, k4 = jax.random.split(key, 4)
    bound1 = 1.0 / (INPUT_SIZE ** 0.5)
    bound2 = 1.0 / (HIDDEN_SIZE ** 0.5)
    return {
        "fc1_w": jax.random.uniform(k1, (HIDDEN_SIZE, INPUT_SIZE),
                                    jnp.float32, -bound1, bound1),
        "fc1_b": jax.random.uniform(k2, (HIDDEN_SIZE,),
                                    jnp.float32, -bound1, bound1),
        "fc2_w": jax.random.uniform(k3, (HIDDEN_SIZE, HIDDEN_SIZE),
                                    jnp.float32, -bound2, bound2),
        "fc2_b": jax.random.uniform(k4, (HIDDEN_SIZE,),
                                    jnp.float32, -bound2, bound2),
    }


if __name__ == "__main__":
    key = jax.random.PRNGKey(0)
    kp, ka, kpp, kn = jax.random.split(key, 4)

    params = init_params(kp)
    prepped = prepare_params(params)          # one-time weight prep

    B = 2
    anchor = jax.random.normal(ka, (B, INPUT_SIZE), jnp.float32)
    positive = jax.random.normal(kpp, (B, INPUT_SIZE), jnp.float32)
    negative = jax.random.normal(kn, (B, INPUT_SIZE), jnp.float32)

    a_out, p_out, n_out = siamese_forward(anchor, positive, negative, prepped)
    jax.block_until_ready((a_out, p_out, n_out))

    # Pure-JAX f32 reference of the original module's eval forward.
    def ref_encode(x):
        h = jnp.maximum(x @ params["fc1_w"].T + params["fc1_b"], 0.0)
        return h @ params["fc2_w"].T + params["fc2_b"]

    assert a_out.shape == (B, HIDDEN_SIZE)
    # bf16 matmul operands => compare against the f32 reference with a loose tolerance.
    assert jnp.allclose(a_out, ref_encode(anchor), atol=3e-2, rtol=3e-2)
    assert jnp.allclose(p_out, ref_encode(positive), atol=3e-2, rtol=3e-2)
    assert jnp.allclose(n_out, ref_encode(negative), atol=3e-2, rtol=3e-2)

    print("KERNEL_OK")
</pallas_src>

<mosaic_0001>
module attributes {stable_mosaic.version = 11 : i64} {
  func.func @_siamese_kernel(%arg0: i32, %arg1: memref<2x112xf32, #tpu.memory_space<vmem>>, %arg2: memref<2x112xf32, #tpu.memory_space<vmem>>, %arg3: memref<2x112xf32, #tpu.memory_space<vmem>>, %arg4: memref<112x64xbf16, #tpu.memory_space<vmem>>, %arg5: memref<1x64xf32, #tpu.memory_space<vmem>>, %arg6: memref<64x64xbf16, #tpu.memory_space<vmem>>, %arg7: memref<1x64xf32, #tpu.memory_space<vmem>>, %arg8: memref<2x64xf32, #tpu.memory_space<vmem>>, %arg9: memref<2x64xf32, #tpu.memory_space<vmem>>, %arg10: memref<2x64xf32, #tpu.memory_space<vmem>>) attributes {dimension_semantics = [#tpu.dimension_semantics<parallel>], iteration_bounds = array<i64: 1>, scalar_prefetch = 0 : i64, scratch_operands = 0 : i64, tpu.core_type = #tpu.core_type<tc>, window_params = [{transform_indices = @transform_0, window_bounds = array<i64: 2, 112>}, {transform_indices = @transform_1, window_bounds = array<i64: 2, 112>}, {transform_indices = @transform_2, window_bounds = array<i64: 2, 112>}, {pipeline_mode = #tpu.pipeline_mode<synchronous>, transform_indices = @transform_3, window_bounds = array<i64: 112, 64>}, {pipeline_mode = #tpu.pipeline_mode<synchronous>, transform_indices = @transform_4, window_bounds = array<i64: 1, 64>}, {pipeline_mode = #tpu.pipeline_mode<synchronous>, transform_indices = @transform_5, window_bounds = array<i64: 64, 64>}, {pipeline_mode = #tpu.pipeline_mode<synchronous>, transform_indices = @transform_6, window_bounds = array<i64: 1, 64>}, {transform_indices = @transform_7, window_bounds = array<i64: 2, 64>}, {transform_indices = @transform_8, window_bounds = array<i64: 2, 64>}, {transform_indices = @transform_9, window_bounds = array<i64: 2, 64>}]} {
    %c0 = arith.constant 0 : index
    %c0_0 = arith.constant 0 : index
    %0 = vector.load %arg4[%c0, %c0_0] : memref<112x64xbf16, #tpu.memory_space<vmem>>, vector<112x64xbf16>
    %c0_1 = arith.constant 0 : index
    %c0_2 = arith.constant 0 : index
    %1 = vector.load %arg5[%c0_1, %c0_2] : memref<1x64xf32, #tpu.memory_space<vmem>>, vector<1x64xf32>
    %c0_3 = arith.constant 0 : index
    %c0_4 = arith.constant 0 : index
    %2 = vector.load %arg6[%c0_3, %c0_4] : memref<64x64xbf16, #tpu.memory_space<vmem>>, vector<64x64xbf16>
    %c0_5 = arith.constant 0 : index
    %c0_6 = arith.constant 0 : index
    %3 = vector.load %arg7[%c0_5, %c0_6] : memref<1x64xf32, #tpu.memory_space<vmem>>, vector<1x64xf32>
    %c0_7 = arith.constant 0 : index
    %c0_8 = arith.constant 0 : index
    %4 = vector.load %arg1[%c0_7, %c0_8] : memref<2x112xf32, #tpu.memory_space<vmem>>, vector<2x112xf32>
    %5 = arith.truncf %4 : vector<2x112xf32> to vector<2x112xbf16>
    %cst = arith.constant dense<0.000000e+00> : vector<2x64xf32>
    %6 = tpu.matmul %5, %0, %cst {dimension_numbers = #tpu.dot_dimension_numbers<[1], [0], [0], [1], [0, 0, 1, 1], [], []>} : vector<2x112xbf16>, vector<112x64xbf16>, vector<2x64xf32> -> vector<2x64xf32>
    %7 = vector.broadcast %1 : vector<1x64xf32> to vector<2x64xf32>
    %8 = arith.addf %6, %7 : vector<2x64xf32>
    %cst_9 = arith.constant 0.000000e+00 : f32
    %9 = vector.broadcast %cst_9 : f32 to vector<2x64xf32>
    %10 = arith.maximumf %8, %9 : vector<2x64xf32>
    %11 = arith.truncf %10 : vector<2x64xf32> to vector<2x64xbf16>
    %cst_10 = arith.constant dense<0.000000e+00> : vector<2x64xf32>
    %12 = tpu.matmul %11, %2, %cst_10 {dimension_numbers = #tpu.dot_dimension_numbers<[1], [0], [0], [1], [0, 0, 1, 1], [], []>} : vector<2x64xbf16>, vector<64x64xbf16>, vector<2x64xf32> -> vector<2x64xf32>
    %13 = vector.broadcast %3 : vector<1x64xf32> to vector<2x64xf32>
    %14 = arith.addf %12, %13 : vector<2x64xf32>
    %c0_11 = arith.constant 0 : index
    %c0_12 = arith.constant 0 : index
    %15 = vector.load %arg8[%c0_11, %c0_12] : memref<2x64xf32, #tpu.memory_space<vmem>>, vector<2x64xf32>
    tpu.vector_store %arg8[%c0_11, %c0_12], %14 {strides = array<i32>} : memref<2x64xf32, #tpu.memory_space<vmem>>, vector<2x64xf32>,
    %c0_13 = arith.constant 0 : index
    %c0_14 = arith.constant 0 : index
    %16 = vector.load %arg2[%c0_13, %c0_14] : memref<2x112xf32, #tpu.memory_space<vmem>>, vector<2x112xf32>
    %17 = arith.truncf %16 : vector<2x112xf32> to vector<2x112xbf16>
    %cst_15 = arith.constant dense<0.000000e+00> : vector<2x64xf32>
    %18 = tpu.matmul %17, %0, %cst_15 {dimension_numbers = #tpu.dot_dimension_numbers<[1], [0], [0], [1], [0, 0, 1, 1], [], []>} : vector<2x112xbf16>, vector<112x64xbf16>, vector<2x64xf32> -> vector<2x64xf32>
    %19 = vector.broadcast %1 : vector<1x64xf32> to vector<2x64xf32>
    %20 = arith.addf %18, %19 : vector<2x64xf32>
    %cst_16 = arith.constant 0.000000e+00 : f32
    %21 = vector.broadcast %cst_16 : f32 to vector<2x64xf32>
    %22 = arith.maximumf %20, %21 : vector<2x64xf32>
    %23 = arith.truncf %22 : vector<2x64xf32> to vector<2x64xbf16>
    %cst_17 = arith.constant dense<0.000000e+00> : vector<2x64xf32>
    %24 = tpu.matmul %23, %2, %cst_17 {dimension_numbers = #tpu.dot_dimension_numbers<[1], [0], [0], [1], [0, 0, 1, 1], [], []>} : vector<2x64xbf16>, vector<64x64xbf16>, vector<2x64xf32> -> vector<2x64xf32>
    %25 = vector.broadcast %3 : vector<1x64xf32> to vector<2x64xf32>
    %26 = arith.addf %24, %25 : vector<2x64xf32>
    %c0_18 = arith.constant 0 : index
    %c0_19 = arith.constant 0 : index
    %27 = vector.load %arg9[%c0_18, %c0_19] : memref<2x64xf32, #tpu.memory_space<vmem>>, vector<2x64xf32>
    tpu.vector_store %arg9[%c0_18, %c0_19], %26 {strides = array<i32>} : memref<2x64xf32, #tpu.memory_space<vmem>>, vector<2x64xf32>,
    %c0_20 = arith.constant 0 : index
    %c0_21 = arith.constant 0 : index
    %28 = vector.load %arg3[%c0_20, %c0_21] : memref<2x112xf32, #tpu.memory_space<vmem>>, vector<2x112xf32>
    %29 = arith.truncf %28 : vector<2x112xf32> to vector<2x112xbf16>
    %cst_22 = arith.constant dense<0.000000e+00> : vector<2x64xf32>
    %30 = tpu.matmul %29, %0, %cst_22 {dimension_numbers = #tpu.dot_dimension_numbers<[1], [0], [0], [1], [0, 0, 1, 1], [], []>} : vector<2x112xbf16>, vector<112x64xbf16>, vector<2x64xf32> -> vector<2x64xf32>
    %31 = vector.broadcast %1 : vector<1x64xf32> to vector<2x64xf32>
    %32 = arith.addf %30, %31 : vector<2x64xf32>
    %cst_23 = arith.constant 0.000000e+00 : f32
    %33 = vector.broadcast %cst_23 : f32 to vector<2x64xf32>
    %34 = arith.maximumf %32, %33 : vector<2x64xf32>
    %35 = arith.truncf %34 : vector<2x64xf32> to vector<2x64xbf16>
    %cst_24 = arith.constant dense<0.000000e+00> : vector<2x64xf32>
    %36 = tpu.matmul %35, %2, %cst_24 {dimension_numbers = #tpu.dot_dimension_numbers<[1], [0], [0], [1], [0, 0, 1, 1], [], []>} : vector<2x64xbf16>, vector<64x64xbf16>, vector<2x64xf32> -> vector<2x64xf32>
    %37 = vector.broadcast %3 : vector<1x64xf32> to vector<2x64xf32>
    %38 = arith.addf %36, %37 : vector<2x64xf32>
    %c0_25 = arith.constant 0 : index
    %c0_26 = arith.constant 0 : index
    %39 = vector.load %arg10[%c0_25, %c0_26] : memref<2x64xf32, #tpu.memory_space<vmem>>, vector<2x64xf32>
    tpu.vector_store %arg10[%c0_25, %c0_26], %38 {strides = array<i32>} : memref<2x64xf32, #tpu.memory_space<vmem>>, vector<2x64xf32>,
    return
  }
  func.func @transform_0(%arg0: i32) -> (i32, i32) {
    %c0_i32 = arith.constant 0 : i32
    %c0_i32_0 = arith.constant 0 : i32
    return %arg0, %c0_i32 : i32, i32
  }
  func.func @transform_1(%arg0: i32) -> (i32, i32) {
    %c0_i32 = arith.constant 0 : i32
    %c0_i32_0 = arith.constant 0 : i32
    return %arg0, %c0_i32 : i32, i32
  }
  func.func @transform_2(%arg0: i32) -> (i32, i32) {
    %c0_i32 = arith.constant 0 : i32
    %c0_i32_0 = arith.constant 0 : i32
    return %arg0, %c0_i32 : i32, i32
  }
  func.func @transform_3(%arg0: i32) -> (i32, i32) {
    %c0_i32 = arith.constant 0 : i32
    %c0_i32_0 = arith.constant 0 : i32
    %c0_i32_1 = arith.constant 0 : i32
    return %c0_i32, %c0_i32_0 : i32, i32
  }
  func.func @transform_4(%arg0: i32) -> (i32, i32) {
    %c0_i32 = arith.constant 0 : i32
    %c0_i32_0 = arith.constant 0 : i32
    %c0_i32_1 = arith.constant 0 : i32
    return %c0_i32, %c0_i32_0 : i32, i32
  }
  func.func @transform_5(%arg0: i32) -> (i32, i32) {
    %c0_i32 = arith.constant 0 : i32
    %c0_i32_0 = arith.constant 0 : i32
    %c0_i32_1 = arith.constant 0 : i32
    return %c0_i32, %c0_i32_0 : i32, i32
  }
  func.func @transform_6(%arg0: i32) -> (i32, i32) {
    %c0_i32 = arith.constant 0 : i32
    %c0_i32_0 = arith.constant 0 : i32
    %c0_i32_1 = arith.constant 0 : i32
    return %c0_i32, %c0_i32_0 : i32, i32
  }
  func.func @transform_7(%arg0: i32) -> (i32, i32) {
    %c0_i32 = arith.constant 0 : i32
    %c0_i32_0 = arith.constant 0 : i32
    return %arg0, %c0_i32 : i32, i32
  }
  func.func @transform_8(%arg0: i32) -> (i32, i32) {
    %c0_i32 = arith.constant 0 : i32
    %c0_i32_0 = arith.constant 0 : i32
    return %arg0, %c0_i32 : i32, i32
  }
  func.func @transform_9(%arg0: i32) -> (i32, i32) {
    %c0_i32 = arith.constant 0 : i32
    %c0_i32_0 = arith.constant 0 : i32
    return %arg0, %c0_i32 : i32, i32
  }
}

</mosaic_0001>

<llo_original>
// kernel: siamese_forward.1
$region0: #{siamese_forward.1}
  #allocation0 [shape = 'u32[]', space=smem, size = 0x4, offset = 0x4, fixed_abs, tag = 'smem constant byte address 0x4 - core index']
  #allocation1 [shape = 'u32[72,128]{1,0:T(1,128)}', space=vmem, size = 0x9000, scoped, tag = 'internal scratch']
  %s0 = inlined_call_operand.vmem [shape: f32[2,112], index: 0, kind: input, shape index: {}]
  %s1 = inlined_call_operand.vmem [shape: f32[2,112], index: 1, kind: input, shape index: {}]
  %s2 = inlined_call_operand.vmem [shape: f32[2,112], index: 2, kind: input, shape index: {}]
  %s3 = inlined_call_operand.vmem [shape: bf16[112,64], index: 3, kind: input, shape index: {}]
  %s4 = inlined_call_operand.vmem [shape: f32[1,64], index: 4, kind: input, shape index: {}]
  %s5 = inlined_call_operand.vmem [shape: bf16[64,64], index: 5, kind: input, shape index: {}]
  %s6 = inlined_call_operand.vmem [shape: f32[1,64], index: 6, kind: input, shape index: {}]
  %s7 = inlined_call_operand.hbm [shape: f32[2,64], index: 7, kind: output, shape index: {0}]
  %s8 = inlined_call_operand.hbm [shape: f32[2,64], index: 8, kind: output, shape index: {1}]
  %s9 = inlined_call_operand.hbm [shape: f32[2,64], index: 9, kind: output, shape index: {2}]
  %10 = xla_tuple %s7, %s8, %s9
  %s11 = sld [smem:[#allocation0]]
  $region54: #{siamese_forward.1} parent=0
    _
  %s13 = ssub.s32 1, %s11
  %s14 = scalar_select 0, %s13, %s11
  $region1: #{siamese_forward.1} parent=0
    #allocation2 [shape = 'u8[1024]{0}', space=vmem, size = 0x400, scoped, tag = 'output window, operand 0, single buffered']
    #allocation3 [shape = 's32[1]{0}', space=sflag, size = 0x4, scoped, tag = 'scoped memory for siamese_forward.1']
    #allocation4 [shape = 'u8[1024]{0}', space=vmem, size = 0x400, scoped, tag = 'output window, operand 1, single buffered']
    #allocation5 [shape = 's32[1]{0}', space=sflag, size = 0x4, scoped, tag = 'scoped memory for siamese_forward.1']
    #allocation6 [shape = 'u8[1024]{0}', space=vmem, size = 0x400, scoped, tag = 'output window, operand 2, single buffered']
    %15 = vsyncpa [#allocation3], 0
    %16 = vsyncpa [#allocation5], 0
    // Predicated region
    $region2: #{siamese_forward.1} parent=1 // pred_check
      _
    $region3: #{siamese_forward.1} parent=1 // pred_check_branch
      %18 = sbr.rel (0) target = $region5
    $region4: #{siamese_forward.1} parent=1 // pred_region
      _
    $region5: #{siamese_forward.1} parent=1 // pred_fallthru
      _
    // Predicated region
    $region6: #{siamese_forward.1} parent=1 // pred_check
      _
    $region7: #{siamese_forward.1} parent=1 // pred_check_branch
      %20 = sbr.rel (0) target = $region9
    $region8: #{siamese_forward.1} parent=1 // pred_region
      _
    $region9: #{siamese_forward.1} parent=1 // pred_fallthru
      _
    // Predicated region
    $region10: #{siamese_forward.1} parent=1 // pred_check
      _
    $region11: #{siamese_forward.1} parent=1 // pred_check_branch
      %22 = sbr.rel (0) target = $region13
    $region12: #{siamese_forward.1} parent=1 // pred_region
      _
    $region13: #{siamese_forward.1} parent=1 // pred_fallthru
      _
    // Predicated region
    $region14: #{siamese_forward.1} parent=1 // pred_check
      _
    $region15: #{siamese_forward.1} parent=1 // pred_check_branch
      %24 = sbr.rel (0) target = $region17
    $region16: #{siamese_forward.1} parent=1 // pred_region
      _
    $region17: #{siamese_forward.1} parent=1 // pred_fallthru
      _
    // Predicated region
    $region18: #{siamese_forward.1} parent=1 // pred_check
      _
    $region19: #{siamese_forward.1} parent=1 // pred_check_branch
      %26 = sbr.rel (0) target = $region21
    $region20: #{siamese_forward.1} parent=1 // pred_region
      _
    $region21: #{siamese_forward.1} parent=1 // pred_fallthru
      _
    // Predicated region
    $region22: #{siamese_forward.1} parent=1 // pred_check
      _
    $region23: #{siamese_forward.1} parent=1 // pred_check_branch
      %28 = sbr.rel (0) target = $region25
    $region24: #{siamese_forward.1} parent=1 // pred_region
      _
    $region25: #{siamese_forward.1} parent=1 // pred_fallthru
      _
    // Predicated region
    $region26: #{siamese_forward.1} parent=1 // pred_check
      _
    $region27: #{siamese_forward.1} parent=1 // pred_check_branch
      %30 = sbr.rel (0) target = $region29
    $region28: #{siamese_forward.1} parent=1 // pred_region
      _
    $region29: #{siamese_forward.1} parent=1 // pred_fallthru
      _
    %v32 = vld [vmem:[%s3] sm:$0xf]
    %v33 = vld [vmem:[%s3 + $0x4] sm:$0xf]
    %v34 = vld [vmem:[%s3 + $0x8] sm:$0xf]
    %v35 = vld [vmem:[%s3 + $0xc] sm:$0xf]
    %v36 = vld [vmem:[%s3 + $0x10] sm:$0xf]
    %v37 = vld [vmem:[%s3 + $0x14] sm:$0xf]
    %v38 = vld [vmem:[%s3 + $0x18] sm:$0xf]
    %v39 = vld [vmem:[%s3 + $0x1c] sm:$0xf]
    %v40 = vld [vmem:[%s3 + $0x20] sm:$0xf]
    %v41 = vld [vmem:[%s3 + $0x24] sm:$0xf]
    %v42 = vld [vmem:[%s3 + $0x28] sm:$0xf]
    %v43 = vld [vmem:[%s3 + $0x2c] sm:$0xf]
    %v44 = vld [vmem:[%s3 + $0x30] sm:$0xf]
    %v45 = vld [vmem:[%s3 + $0x34] sm:$0xf]
    %v46 = vld [vmem:[%s4] sm:$0x1]
    %v47 = vld [vmem:[%s5] sm:$0xf]
    %v48 = vld [vmem:[%s5 + $0x4] sm:$0xf]
    %v49 = vld [vmem:[%s5 + $0x8] sm:$0xf]
    %v50 = vld [vmem:[%s5 + $0xc] sm:$0xf]
    %v51 = vld [vmem:[%s5 + $0x10] sm:$0xf]
    %v52 = vld [vmem:[%s5 + $0x14] sm:$0xf]
    %v53 = vld [vmem:[%s5 + $0x18] sm:$0xf]
    %v54 = vld [vmem:[%s5 + $0x1c] sm:$0xf]
    %v55 = vld [vmem:[%s6] sm:$0x1]
    %v56 = vld [vmem:[%s0] sm:$0x3]
    %v57 = vpack.c.bf16 %v56, %v56
    %v59 = vperm.slane %v46, 0
    %v75 = vunpack.c.l.b16 %v32
    %v76 = vunpack.c.l.b16 %v33
    %v77 = vunpack.c.l.b16 %v34
    %v78 = vunpack.c.l.b16 %v35
    %v79 = vunpack.c.l.b16 %v36
    %v80 = vunpack.c.l.b16 %v37
    %v81 = vunpack.c.l.b16 %v38
    %v82 = vunpack.c.l.b16 %v39
    %v83 = vunpack.c.l.b16 %v40
    %v84 = vunpack.c.l.b16 %v41
    %v85 = vunpack.c.l.b16 %v42
    %v86 = vunpack.c.l.b16 %v43
    %v87 = vunpack.c.l.b16 %v44
    %v88 = vunpack.c.l.b16 %v45
    %v89 = vpack.c.b16 %v76, %v75
    %v90 = vpack.c.b16 %v78, %v77
    %v91 = vpack.c.b16 %v80, %v79
    %v92 = vpack.c.b16 %v82, %v81
    %v93 = vpack.c.b16 %v84, %v83
    %v94 = vpack.c.b16 %v86, %v85
    %v95 = vpack.c.b16 %v88, %v87
    %vm103 = vcmask 916480
    %v105 = vsel %vm103, %v57, 0
    %107 = vmatpush.bf16.msra.mxu0 0
    %108 = vmatpush.bf16.msra.mxu0 %v95
    %109 = vmatpush.bf16.msra.mxu0 %v94
    %110 = vmatpush.bf16.msra.mxu0 %v93
    %111 = vmatpush.bf16.msra.mxu0 %v92
    %112 = vmatpush.bf16.msra.mxu0 %v91
    %113 = vmatpush.bf16.msra.mxu0 %v90
    %114 = vmatpush.bf16.msra.mxu0 %v89
    %115 = vmatmul.bf16.gmra.mxu0 %v105
    %v116 = vpop.f32.mrf.mxu0
    %v117 = vadd.f32 %v59, %v116
    %v118 = vpop.f32.mrf.mxu0
    %119 = vdwg.mxu0
    %v120 = vmax.f32 %v117, 0.0
    %v121 = vpack.c.bf16 %v120, %v120
    %v123 = vperm.slane %v55, 0
    %v133 = vunpack.c.l.b16 %v47
    %v134 = vunpack.c.l.b16 %v48
    %v135 = vunpack.c.l.b16 %v49
    %v136 = vunpack.c.l.b16 %v50
    %v137 = vunpack.c.l.b16 %v51
    %v138 = vunpack.c.l.b16 %v52
    %v139 = vunpack.c.l.b16 %v53
    %v140 = vunpack.c.l.b16 %v54
    %v141 = vpack.c.b16 %v134, %v133
    %v142 = vpack.c.b16 %v136, %v135
    %v143 = vpack.c.b16 %v138, %v137
    %v144 = vpack.c.b16 %v140, %v139
    %vm149 = vcmask 523264
    %v151 = vsel %vm149, %v121, 0
    %153 = vmatpush.bf16.msra.mxu0 0
    %154 = vmatpush.bf16.msra.mxu0 0
    %155 = vmatpush.bf16.msra.mxu0 0
    %156 = vmatpush.bf16.msra.mxu0 0
    %157 = vmatpush.bf16.msra.mxu0 %v144
    %158 = vmatpush.bf16.msra.mxu0 %v143
    %159 = vmatpush.bf16.msra.mxu0 %v142
    %160 = vmatpush.bf16.msra.mxu0 %v141
    %161 = vmatmul.bf16.gmra.mxu0 %v151
    %v162 = vpop.f32.mrf.mxu0
    %v163 = vadd.f32 %v123, %v162
    %v164 = vpop.f32.mrf.mxu0
    %165 = vdwg.mxu0
    %vm166 = vcmask 517120
    %167 = vst.msk [vmem:[#allocation2] sm:$0x3] %vm166, %v163
    %v168 = vld [vmem:[%s1] sm:$0x3]
    %v169 = vpack.c.bf16 %v168, %v168
    %v171 = vsel %vm103, %v169, 0
    %173 = vmatpush.bf16.msra.mxu0 0
    %174 = vmatpush.bf16.msra.mxu0 %v95
    %175 = vmatpush.bf16.msra.mxu0 %v94
    %176 = vmatpush.bf16.msra.mxu0 %v93
    %177 = vmatpush.bf16.msra.mxu0 %v92
    %178 = vmatpush.bf16.msra.mxu0 %v91
    %179 = vmatpush.bf16.msra.mxu0 %v90
    %180 = vmatpush.bf16.msra.mxu0 %v89
    %181 = vmatmul.bf16.gmra.mxu0 %v171
    %v182 = vpop.f32.mrf.mxu0
    %v183 = vadd.f32 %v59, %v182
    %v184 = vpop.f32.mrf.mxu0
    %185 = vdwg.mxu0
    %v186 = vmax.f32 %v183, 0.0
    %v187 = vpack.c.bf16 %v186, %v186
    %v189 = vsel %vm149, %v187, 0
    %191 = vmatpush.bf16.msra.mxu0 0
    %192 = vmatpush.bf16.msra.mxu0 0
    %193 = vmatpush.bf16.msra.mxu0 0
    %194 = vmatpush.bf16.msra.mxu0 0
    %195 = vmatpush.bf16.msra.mxu0 %v144
    %196 = vmatpush.bf16.msra.mxu0 %v143
    %197 = vmatpush.bf16.msra.mxu0 %v142
    %198 = vmatpush.bf16.msra.mxu0 %v141
    %199 = vmatmul.bf16.gmra.mxu0 %v189
    %v200 = vpop.f32.mrf.mxu0
    %v201 = vadd.f32 %v123, %v200
    %v202 = vpop.f32.mrf.mxu0
    %203 = vdwg.mxu0
    %204 = vst.msk [vmem:[#allocation4] sm:$0x3] %vm166, %v201
    %v205 = vld [vmem:[%s2] sm:$0x3]
    %v206 = vpack.c.bf16 %v205, %v205
    %v208 = vsel %vm103, %v206, 0
    %210 = vmatpush.bf16.msra.mxu0 0
    %211 = vmatpush.bf16.msra.mxu0 %v95
    %212 = vmatpush.bf16.msra.mxu0 %v94
    %213 = vmatpush.bf16.msra.mxu0 %v93
    %214 = vmatpush.bf16.msra.mxu0 %v92
    %215 = vmatpush.bf16.msra.mxu0 %v91
    %216 = vmatpush.bf16.msra.mxu0 %v90
    %217 = vmatpush.bf16.msra.mxu0 %v89
    %218 = vmatmul.bf16.gmra.mxu0 %v208
    %v219 = vpop.f32.mrf.mxu0
    %v220 = vadd.f32 %v59, %v219
    %v221 = vpop.f32.mrf.mxu0
    %222 = vdwg.mxu0
    %v223 = vmax.f32 %v220, 0.0
    %v224 = vpack.c.bf16 %v223, %v223
    %v226 = vsel %vm149, %v224, 0
    %228 = vmatpush.bf16.msra.mxu0 0
    %229 = vmatpush.bf16.msra.mxu0 0
    %230 = vmatpush.bf16.msra.mxu0 0
    %231 = vmatpush.bf16.msra.mxu0 0
    %232 = vmatpush.bf16.msra.mxu0 %v144
    %233 = vmatpush.bf16.msra.mxu0 %v143
    %234 = vmatpush.bf16.msra.mxu0 %v142
    %235 = vmatpush.bf16.msra.mxu0 %v141
    %236 = vmatmul.bf16.gmra.mxu0 %v226
    %v237 = vpop.f32.mrf.mxu0
    %v238 = vadd.f32 %v123, %v237
    %v239 = vpop.f32.mrf.mxu0
    %240 = vdwg.mxu0
    %241 = vst.msk [vmem:[#allocation6] sm:$0x3] %vm166, %v238
    // Predicated region
    $region30: #{siamese_forward.1} parent=1 // pred_check
      _
    $region31: #{siamese_forward.1} parent=1 // pred_check_branch
      %243 = sbr.rel (0) target = $region33
    $region32: #{siamese_forward.1} parent=1 // pred_region
      %245 = vsyncadd [#allocation3], 0
      %s247 = sshll.u32 [#allocation2], 4
      %s248 = int_to_ptr.vmem [resolvable:$true] %s247
      %s249 = sshll.u32 %s7, 4
      %s250 = int_to_ptr.hbm [resolvable:$true] %s249
      %252 = dma.vmem_to_hbm [thread:$0]  %s248, 32, %s250, [#allocation3]
    $region33: #{siamese_forward.1} parent=1 // pred_fallthru
      _
    // Predicated region
    $region34: #{siamese_forward.1} parent=1 // pred_check
      _
    $region35: #{siamese_forward.1} parent=1 // pred_check_branch
      %254 = sbr.rel (0) target = $region37
    $region36: #{siamese_forward.1} parent=1 // pred_region
      %256 = vsyncadd [#allocation5], 0
      %s258 = sshll.u32 [#allocation4], 4
      %s259 = int_to_ptr.vmem [resolvable:$true] %s258
      %s260 = sshll.u32 %s8, 4
      %s261 = int_to_ptr.hbm [resolvable:$true] %s260
      %263 = dma.vmem_to_hbm [thread:$0]  %s259, 32, %s261, [#allocation5]
    $region37: #{siamese_forward.1} parent=1 // pred_fallthru
      _
    // Predicated region
    $region38: #{siamese_forward.1} parent=1 // pred_check
      _
    $region39: #{siamese_forward.1} parent=1 // pred_check_branch
      %265 = sbr.rel (0) target = $region41
    $region40: #{siamese_forward.1} parent=1 // pred_region
      %267 = vsyncadd [#allocation5], 0
      %s269 = sshll.u32 [#allocation6], 4
      %s270 = int_to_ptr.vmem [resolvable:$true] %s269
      %s271 = sshll.u32 %s9, 4
      %s272 = int_to_ptr.hbm [resolvable:$true] %s271
      %274 = dma.vmem_to_hbm [thread:$0]  %s270, 32, %s272, [#allocation5]
    $region41: #{siamese_forward.1} parent=1 // pred_fallthru
      _
    // Predicated region
    $region42: #{siamese_forward.1} parent=1 // pred_check
      _
    $region43: #{siamese_forward.1} parent=1 // pred_check_branch
      %276 = sbr.rel (0) target = $region45
    $region44: #{siamese_forward.1} parent=1 // pred_region
      %278 = dma.done [#allocation3], 32
    $region45: #{siamese_forward.1} parent=1 // pred_fallthru
      _
    // Predicated region
    $region46: #{siamese_forward.1} parent=1 // pred_check
      _
    $region47: #{siamese_forward.1} parent=1 // pred_check_branch
      %280 = sbr.rel (0) target = $region49
    $region48: #{siamese_forward.1} parent=1 // pred_region
      %282 = dma.done [#allocation5], 32
    $region49: #{siamese_forward.1} parent=1 // pred_fallthru
      _
    // Predicated region
    $region50: #{siamese_forward.1} parent=1 // pred_check
      _
    $region51: #{siamese_forward.1} parent=1 // pred_check_branch
      %284 = sbr.rel (0) target = $region53
    $region52: #{siamese_forward.1} parent=1 // pred_region
      %286 = dma.done [#allocation5], 32
    $region53: #{siamese_forward.1} parent=1 // pred_fallthru
      _
    %287 = vsyncpa [#allocation3], 1
    %288 = vsyncpa [#allocation5], 1

</llo_original>
